<compile_context>
chip_gen: v7x
topology: tpu7x:2x2x1
jax: 0.10.0
libtpu: 0.0.40
codegen_flags: <defaults>
</compile_context>

<pallas_src>
import jax
import jax.numpy as jnp
from jax.experimental import pallas as pl
from jax.experimental.pallas import tpu as pltpu


def _gather_kernel(ids_ref, *refs):
    """Copy G gathered embedding rows into the (G, D) output tile.

    refs = (emb_ref_0, ..., emb_ref_{G-1}, out_ref).  Each emb_ref_g is the
    (1, 1, D) table row selected by its data-dependent index_map (token id
    read from the scalar-prefetched ids in SMEM), so the body is just copies.
    """
    del ids_ref  # consumed by the index_maps, not by the body
    emb_refs, out_ref = refs[:-1], refs[-1]
    for g, emb_ref in enumerate(emb_refs):
        row = emb_ref[...]                                  # (1, 1, D)
        out_ref[pl.ds(g, 1), :] = row.reshape(1, row.shape[-1])


def embedding_lookup(input_ids, embedding, *, rows_per_step=8):
    """Pallas equivalent of nn.Embedding(V, D)(input_ids).

    input_ids: integer array of any shape (e.g. [B, S])
    embedding: float array [V, D] (f32 or bf16 — kernel is dtype-agnostic)
    returns:   float array input_ids.shape + (D,), dtype == embedding.dtype
    """
    orig_shape = input_ids.shape
    vocab, d_model = embedding.shape
    g = rows_per_step

    # Flatten, clamp (DMA safety for any out-of-range id), pad to a multiple
    # of the per-step row count.  Padded tokens gather row 0 and are sliced
    # off afterwards.
    flat_ids = jnp.clip(input_ids.reshape(-1).astype(jnp.int32), 0, vocab - 1)
    n = flat_ids.shape[0]
    n_pad = pl.cdiv(n, g) * g
    if n_pad != n:
        flat_ids = jnp.pad(flat_ids, (0, n_pad - n))

    # View the table as (V, 1, D) so every block's last two dims equal the
    # full array dims (clean TPU layout); the gather dim is the leading axis.
    emb3 = embedding.reshape(vocab, 1, d_model)

    def emb_index_map(slot):
        # index_map receives (grid_i, *prefetch_refs); block size along the
        # vocab axis is 1, so block index == row index == token id.
        def index_map(i, ids):
            return (ids[i * g + slot], 0, 0)
        return index_map

    grid = (n_pad // g,)

    out = pl.pallas_call(
        _gather_kernel,
        out_shape=jax.ShapeDtypeStruct((n_pad, d_model), embedding.dtype),
        grid_spec=pltpu.PrefetchScalarGridSpec(
            num_scalar_prefetch=1,
            grid=grid,
            in_specs=[pl.BlockSpec((1, 1, d_model), emb_index_map(s))
                      for s in range(g)],
            out_specs=pl.BlockSpec((g, d_model), lambda i, ids: (i, 0)),
        ),
        compiler_params=pltpu.CompilerParams(
            dimension_semantics=("parallel",)),   # megacore-shard token tiles (v7x)
    )(flat_ids, *([emb3] * g))

    return out[:n].reshape(*orig_shape, d_model)


class EncDecEmbeddingsPallas:
    """Mirror of the PyTorch EncDecEmbeddings module (shared embedding only)."""

    def __init__(self, vocab_size, d_model, key):
        # nn.Embedding default init: N(0, 1)
        self.shared_weight = jax.random.normal(
            key, (vocab_size, d_model), dtype=jnp.float32)

    def __call__(self, input_ids, **kwargs):
        return embedding_lookup(input_ids, self.shared_weight)


if __name__ == "__main__":
    key = jax.random.PRNGKey(0)
    k_emb, k_ids = jax.random.split(key)

    vocab_size = 64
    d_model = 32
    batch = 2
    seq = 8

    module = EncDecEmbeddingsPallas(vocab_size, d_model, k_emb)
    input_ids = jax.random.randint(k_ids, (batch, seq), 0, vocab_size,
                                   dtype=jnp.int32)

    hidden_states = module(input_ids)
    hidden_states = jax.block_until_ready(hidden_states)

    # Reference: plain gather.
    ref = jnp.take(module.shared_weight, input_ids, axis=0)
    assert hidden_states.shape == (batch, seq, d_model)
    assert jnp.allclose(hidden_states, ref, atol=1e-6), "mismatch vs reference"

    print("KERNEL_OK")
</pallas_src>

<mosaic_0001>
module attributes {stable_mosaic.version = 11 : i64} {
  func.func @_gather_kernel(%arg0: i32, %arg1: memref<16xi32, #tpu.memory_space<smem>>, %arg2: memref<1x1x32xf32, #tpu.memory_space<vmem>>, %arg3: memref<1x1x32xf32, #tpu.memory_space<vmem>>, %arg4: memref<1x1x32xf32, #tpu.memory_space<vmem>>, %arg5: memref<1x1x32xf32, #tpu.memory_space<vmem>>, %arg6: memref<1x1x32xf32, #tpu.memory_space<vmem>>, %arg7: memref<1x1x32xf32, #tpu.memory_space<vmem>>, %arg8: memref<1x1x32xf32, #tpu.memory_space<vmem>>, %arg9: memref<1x1x32xf32, #tpu.memory_space<vmem>>, %arg10: memref<8x32xf32, #tpu.memory_space<vmem>>) attributes {dimension_semantics = [#tpu.dimension_semantics<parallel>], iteration_bounds = array<i64: 2>, scalar_prefetch = 1 : i64, scratch_operands = 0 : i64, tpu.core_type = #tpu.core_type<tc>, window_params = [{transform_indices = @transform_0, window_bounds = array<i64: 1, 1, 32>}, {transform_indices = @transform_1, window_bounds = array<i64: 1, 1, 32>}, {transform_indices = @transform_2, window_bounds = array<i64: 1, 1, 32>}, {transform_indices = @transform_3, window_bounds = array<i64: 1, 1, 32>}, {transform_indices = @transform_4, window_bounds = array<i64: 1, 1, 32>}, {transform_indices = @transform_5, window_bounds = array<i64: 1, 1, 32>}, {transform_indices = @transform_6, window_bounds = array<i64: 1, 1, 32>}, {transform_indices = @transform_7, window_bounds = array<i64: 1, 1, 32>}, {transform_indices = @transform_8, window_bounds = array<i64: 8, 32>}]} {
    %c0 = arith.constant 0 : index
    %c0_0 = arith.constant 0 : index
    %c0_1 = arith.constant 0 : index
    %0 = vector.load %arg2[%c0, %c0_0, %c0_1] : memref<1x1x32xf32, #tpu.memory_space<vmem>>, vector<1x1x32xf32>
    %1 = vector.shape_cast %0 : vector<1x1x32xf32> to vector<1x32xf32>
    %c0_2 = arith.constant 0 : index
    %c0_3 = arith.constant 0 : index
    %2 = vector.load %arg10[%c0_2, %c0_3] : memref<8x32xf32, #tpu.memory_space<vmem>>, vector<1x32xf32>
    tpu.vector_store %arg10[%c0_2, %c0_3], %1 {strides = array<i32>} : memref<8x32xf32, #tpu.memory_space<vmem>>, vector<1x32xf32>,
    %c0_4 = arith.constant 0 : index
    %c0_5 = arith.constant 0 : index
    %c0_6 = arith.constant 0 : index
    %3 = vector.load %arg3[%c0_4, %c0_5, %c0_6] : memref<1x1x32xf32, #tpu.memory_space<vmem>>, vector<1x1x32xf32>
    %4 = vector.shape_cast %3 : vector<1x1x32xf32> to vector<1x32xf32>
    %c1 = arith.constant 1 : index
    %c0_7 = arith.constant 0 : index
    %5 = vector.load %arg10[%c1, %c0_7] : memref<8x32xf32, #tpu.memory_space<vmem>>, vector<1x32xf32>
    tpu.vector_store %arg10[%c1, %c0_7], %4 {strides = array<i32>} : memref<8x32xf32, #tpu.memory_space<vmem>>, vector<1x32xf32>,
    %c0_8 = arith.constant 0 : index
    %c0_9 = arith.constant 0 : index
    %c0_10 = arith.constant 0 : index
    %6 = vector.load %arg4[%c0_8, %c0_9, %c0_10] : memref<1x1x32xf32, #tpu.memory_space<vmem>>, vector<1x1x32xf32>
    %7 = vector.shape_cast %6 : vector<1x1x32xf32> to vector<1x32xf32>
    %c2 = arith.constant 2 : index
    %c0_11 = arith.constant 0 : index
    %8 = vector.load %arg10[%c2, %c0_11] : memref<8x32xf32, #tpu.memory_space<vmem>>, vector<1x32xf32>
    tpu.vector_store %arg10[%c2, %c0_11], %7 {strides = array<i32>} : memref<8x32xf32, #tpu.memory_space<vmem>>, vector<1x32xf32>,
    %c0_12 = arith.constant 0 : index
    %c0_13 = arith.constant 0 : index
    %c0_14 = arith.constant 0 : index
    %9 = vector.load %arg5[%c0_12, %c0_13, %c0_14] : memref<1x1x32xf32, #tpu.memory_space<vmem>>, vector<1x1x32xf32>
    %10 = vector.shape_cast %9 : vector<1x1x32xf32> to vector<1x32xf32>
    %c3 = arith.constant 3 : index
    %c0_15 = arith.constant 0 : index
    %11 = vector.load %arg10[%c3, %c0_15] : memref<8x32xf32, #tpu.memory_space<vmem>>, vector<1x32xf32>
    tpu.vector_store %arg10[%c3, %c0_15], %10 {strides = array<i32>} : memref<8x32xf32, #tpu.memory_space<vmem>>, vector<1x32xf32>,
    %c0_16 = arith.constant 0 : index
    %c0_17 = arith.constant 0 : index
    %c0_18 = arith.constant 0 : index
    %12 = vector.load %arg6[%c0_16, %c0_17, %c0_18] : memref<1x1x32xf32, #tpu.memory_space<vmem>>, vector<1x1x32xf32>
    %13 = vector.shape_cast %12 : vector<1x1x32xf32> to vector<1x32xf32>
    %c4 = arith.constant 4 : index
    %c0_19 = arith.constant 0 : index
    %14 = vector.load %arg10[%c4, %c0_19] : memref<8x32xf32, #tpu.memory_space<vmem>>, vector<1x32xf32>
    tpu.vector_store %arg10[%c4, %c0_19], %13 {strides = array<i32>} : memref<8x32xf32, #tpu.memory_space<vmem>>, vector<1x32xf32>,
    %c0_20 = arith.constant 0 : index
    %c0_21 = arith.constant 0 : index
    %c0_22 = arith.constant 0 : index
    %15 = vector.load %arg7[%c0_20, %c0_21, %c0_22] : memref<1x1x32xf32, #tpu.memory_space<vmem>>, vector<1x1x32xf32>
    %16 = vector.shape_cast %15 : vector<1x1x32xf32> to vector<1x32xf32>
    %c5 = arith.constant 5 : index
    %c0_23 = arith.constant 0 : index
    %17 = vector.load %arg10[%c5, %c0_23] : memref<8x32xf32, #tpu.memory_space<vmem>>, vector<1x32xf32>
    tpu.vector_store %arg10[%c5, %c0_23], %16 {strides = array<i32>} : memref<8x32xf32, #tpu.memory_space<vmem>>, vector<1x32xf32>,
    %c0_24 = arith.constant 0 : index
    %c0_25 = arith.constant 0 : index
    %c0_26 = arith.constant 0 : index
    %18 = vector.load %arg8[%c0_24, %c0_25, %c0_26] : memref<1x1x32xf32, #tpu.memory_space<vmem>>, vector<1x1x32xf32>
    %19 = vector.shape_cast %18 : vector<1x1x32xf32> to vector<1x32xf32>
    %c6 = arith.constant 6 : index
    %c0_27 = arith.constant 0 : index
    %20 = vector.load %arg10[%c6, %c0_27] : memref<8x32xf32, #tpu.memory_space<vmem>>, vector<1x32xf32>
    tpu.vector_store %arg10[%c6, %c0_27], %19 {strides = array<i32>} : memref<8x32xf32, #tpu.memory_space<vmem>>, vector<1x32xf32>,
    %c0_28 = arith.constant 0 : index
    %c0_29 = arith.constant 0 : index
    %c0_30 = arith.constant 0 : index
    %21 = vector.load %arg9[%c0_28, %c0_29, %c0_30] : memref<1x1x32xf32, #tpu.memory_space<vmem>>, vector<1x1x32xf32>
    %22 = vector.shape_cast %21 : vector<1x1x32xf32> to vector<1x32xf32>
    %c7 = arith.constant 7 : index
    %c0_31 = arith.constant 0 : index
    %23 = vector.load %arg10[%c7, %c0_31] : memref<8x32xf32, #tpu.memory_space<vmem>>, vector<1x32xf32>
    tpu.vector_store %arg10[%c7, %c0_31], %22 {strides = array<i32>} : memref<8x32xf32, #tpu.memory_space<vmem>>, vector<1x32xf32>,
    return
  }
  func.func @transform_0(%arg0: i32, %arg1: memref<16xi32, #tpu.memory_space<smem>>) -> (i32, i32, i32) {
    %c8_i32 = arith.constant 8 : i32
    %0 = arith.muli %arg0, %c8_i32 : i32
    %c0_i32 = arith.constant 0 : i32
    %1 = arith.addi %0, %c0_i32 : i32
    %2 = arith.index_cast %1 : i32 to index
    %3 = memref.load %arg1[%2] : memref<16xi32, #tpu.memory_space<smem>>
    %c0_i32_0 = arith.constant 0 : i32
    %c0_i32_1 = arith.constant 0 : i32
    %c0_i32_2 = arith.constant 0 : i32
    return %3, %c0_i32_0, %c0_i32_1 : i32, i32, i32
  }
  func.func @transform_1(%arg0: i32, %arg1: memref<16xi32, #tpu.memory_space<smem>>) -> (i32, i32, i32) {
    %c8_i32 = arith.constant 8 : i32
    %0 = arith.muli %arg0, %c8_i32 : i32
    %c1_i32 = arith.constant 1 : i32
    %1 = arith.addi %0, %c1_i32 : i32
    %2 = arith.index_cast %1 : i32 to index
    %3 = memref.load %arg1[%2] : memref<16xi32, #tpu.memory_space<smem>>
    %c0_i32 = arith.constant 0 : i32
    %c0_i32_0 = arith.constant 0 : i32
    %c0_i32_1 = arith.constant 0 : i32
    return %3, %c0_i32, %c0_i32_0 : i32, i32, i32
  }
  func.func @transform_2(%arg0: i32, %arg1: memref<16xi32, #tpu.memory_space<smem>>) -> (i32, i32, i32) {
    %c8_i32 = arith.constant 8 : i32
    %0 = arith.muli %arg0, %c8_i32 : i32
    %c2_i32 = arith.constant 2 : i32
    %1 = arith.addi %0, %c2_i32 : i32
    %2 = arith.index_cast %1 : i32 to index
    %3 = memref.load %arg1[%2] : memref<16xi32, #tpu.memory_space<smem>>
    %c0_i32 = arith.constant 0 : i32
    %c0_i32_0 = arith.constant 0 : i32
    %c0_i32_1 = arith.constant 0 : i32
    return %3, %c0_i32, %c0_i32_0 : i32, i32, i32
  }
  func.func @transform_3(%arg0: i32, %arg1: memref<16xi32, #tpu.memory_space<smem>>) -> (i32, i32, i32) {
    %c8_i32 = arith.constant 8 : i32
    %0 = arith.muli %arg0, %c8_i32 : i32
    %c3_i32 = arith.constant 3 : i32
    %1 = arith.addi %0, %c3_i32 : i32
    %2 = arith.index_cast %1 : i32 to index
    %3 = memref.load %arg1[%2] : memref<16xi32, #tpu.memory_space<smem>>
    %c0_i32 = arith.constant 0 : i32
    %c0_i32_0 = arith.constant 0 : i32
    %c0_i32_1 = arith.constant 0 : i32
    return %3, %c0_i32, %c0_i32_0 : i32, i32, i32
  }
  func.func @transform_4(%arg0: i32, %arg1: memref<16xi32, #tpu.memory_space<smem>>) -> (i32, i32, i32) {
    %c8_i32 = arith.constant 8 : i32
    %0 = arith.muli %arg0, %c8_i32 : i32
    %c4_i32 = arith.constant 4 : i32
    %1 = arith.addi %0, %c4_i32 : i32
    %2 = arith.index_cast %1 : i32 to index
    %3 = memref.load %arg1[%2] : memref<16xi32, #tpu.memory_space<smem>>
    %c0_i32 = arith.constant 0 : i32
    %c0_i32_0 = arith.constant 0 : i32
    %c0_i32_1 = arith.constant 0 : i32
    return %3, %c0_i32, %c0_i32_0 : i32, i32, i32
  }
  func.func @transform_5(%arg0: i32, %arg1: memref<16xi32, #tpu.memory_space<smem>>) -> (i32, i32, i32) {
    %c8_i32 = arith.constant 8 : i32
    %0 = arith.muli %arg0, %c8_i32 : i32
    %c5_i32 = arith.constant 5 : i32
    %1 = arith.addi %0, %c5_i32 : i32
    %2 = arith.index_cast %1 : i32 to index
    %3 = memref.load %arg1[%2] : memref<16xi32, #tpu.memory_space<smem>>
    %c0_i32 = arith.constant 0 : i32
    %c0_i32_0 = arith.constant 0 : i32
    %c0_i32_1 = arith.constant 0 : i32
    return %3, %c0_i32, %c0_i32_0 : i32, i32, i32
  }
  func.func @transform_6(%arg0: i32, %arg1: memref<16xi32, #tpu.memory_space<smem>>) -> (i32, i32, i32) {
    %c8_i32 = arith.constant 8 : i32
    %0 = arith.muli %arg0, %c8_i32 : i32
    %c6_i32 = arith.constant 6 : i32
    %1 = arith.addi %0, %c6_i32 : i32
    %2 = arith.index_cast %1 : i32 to index
    %3 = memref.load %arg1[%2] : memref<16xi32, #tpu.memory_space<smem>>
    %c0_i32 = arith.constant 0 : i32
    %c0_i32_0 = arith.constant 0 : i32
    %c0_i32_1 = arith.constant 0 : i32
    return %3, %c0_i32, %c0_i32_0 : i32, i32, i32
  }
  func.func @transform_7(%arg0: i32, %arg1: memref<16xi32, #tpu.memory_space<smem>>) -> (i32, i32, i32) {
    %c8_i32 = arith.constant 8 : i32
    %0 = arith.muli %arg0, %c8_i32 : i32
    %c7_i32 = arith.constant 7 : i32
    %1 = arith.addi %0, %c7_i32 : i32
    %2 = arith.index_cast %1 : i32 to index
    %3 = memref.load %arg1[%2] : memref<16xi32, #tpu.memory_space<smem>>
    %c0_i32 = arith.constant 0 : i32
    %c0_i32_0 = arith.constant 0 : i32
    %c0_i32_1 = arith.constant 0 : i32
    return %3, %c0_i32, %c0_i32_0 : i32, i32, i32
  }
  func.func @transform_8(%arg0: i32, %arg1: memref<16xi32, #tpu.memory_space<smem>>) -> (i32, i32) {
    %c0_i32 = arith.constant 0 : i32
    %c0_i32_0 = arith.constant 0 : i32
    return %arg0, %c0_i32 : i32, i32
  }
}

</mosaic_0001>

<llo_original>
// kernel: tpu_custom_call.1
$region0: #{tpu_custom_call.1}
  #allocation0 [shape = 'u32[]', space=smem, size = 0x4, offset = 0x4, fixed_abs, tag = 'smem constant byte address 0x4 - core index']
  #allocation1 [shape = 'u32[144,128]{1,0:T(1,128)}', space=vmem, size = 0x12000, scoped, tag = 'internal scratch']
  #allocation2 [shape = 's32[1]{0}', space=sflag, size = 0x4, scoped, tag = 'scoped memory for tpu_custom_call.1']
  #allocation3 [shape = 'u8[512]{0}', space=smem, size = 0x200, scoped, tag = 'prefetched SMEM operand 0']
  %s0 = inlined_call_operand.vmem [shape: s32[16], index: 0, kind: input, shape index: {}]
  %s1 = inlined_call_operand.vmem [shape: f32[64,1,32], index: 1, kind: input, shape index: {}]
  %s2 = inlined_call_operand.vmem [shape: f32[64,1,32], index: 2, kind: input, shape index: {}]
  %s3 = inlined_call_operand.vmem [shape: f32[64,1,32], index: 3, kind: input, shape index: {}]
  %s4 = inlined_call_operand.vmem [shape: f32[64,1,32], index: 4, kind: input, shape index: {}]
  %s5 = inlined_call_operand.vmem [shape: f32[64,1,32], index: 5, kind: input, shape index: {}]
  %s6 = inlined_call_operand.vmem [shape: f32[64,1,32], index: 6, kind: input, shape index: {}]
  %s7 = inlined_call_operand.vmem [shape: f32[64,1,32], index: 7, kind: input, shape index: {}]
  %s8 = inlined_call_operand.vmem [shape: f32[64,1,32], index: 8, kind: input, shape index: {}]
  %s9 = inlined_call_operand.hbm [shape: f32[16,32], index: 9, kind: output, shape index: {}]
  %s10 = sld [smem:[#allocation0]]
  $region65: #{tpu_custom_call.1} parent=0
    _
  %s12 = ssub.s32 1, %s10
  %s13 = scalar_select 0, %s12, %s10
  %s14 = sshll.u32 %s0, 4
  %s15 = int_to_ptr.vmem [resolvable:$true] %s14
  %17 = dma.vmem_to_smem %s15, 16, [#allocation3], [#allocation2]
  %18 = dma.done [#allocation2], 16
  %19 = sfence
  $region1: #{tpu_custom_call.1} parent=0
    #allocation4 [shape = 'u8[8192]{0}', space=vmem, size = 0x2000, scoped, tag = 'output window, operand 0']
    #allocation5 [shape = 's32[2]{0}', space=sflag, size = 0x8, scoped, tag = 'scoped memory for tpu_custom_call.1']
    %20 = vsyncpa [#allocation5], 0
    %s21 = scalar_lea.sflag [#allocation5], 1
    %22 = vsyncpa %s21, 0
    loop: start=0, step=1, limit=4
    $region2: #{tpu_custom_call.1} parent=1 // loop_pre_header
      _
    $region3: #{tpu_custom_call.1} parent=1 // loop_header
      %s24 = sphi 0, %s28
      %p25 = scmp.ge.s32.totalorder %s24, 4
      %s38 = sphi 0, %s40
      %s41 = sphi 0, %s38
      %s42 = sphi 0, %s41
      %s58 = sphi 0, %s42
      %s70 = sphi 0, %s72
      %s73 = sphi 0, %s70
      %s74 = sphi 0, %s73
      %s90 = sphi 0, %s74
      %s102 = sphi 0, %s104
      %s105 = sphi 0, %s102
      %s106 = sphi 0, %s105
      %s122 = sphi 0, %s106
      %s134 = sphi 0, %s136
      %s137 = sphi 0, %s134
      %s138 = sphi 0, %s137
      %s154 = sphi 0, %s138
      %s166 = sphi 0, %s168
      %s169 = sphi 0, %s166
      %s170 = sphi 0, %s169
      %s186 = sphi 0, %s170
      %s198 = sphi 0, %s200
      %s201 = sphi 0, %s198
      %s202 = sphi 0, %s201
      %s218 = sphi 0, %s202
      %s230 = sphi 0, %s232
      %s233 = sphi 0, %s230
      %s234 = sphi 0, %s233
      %s250 = sphi 0, %s234
      %s262 = sphi 0, %s264
      %s265 = sphi 0, %s262
      %s266 = sphi 0, %s265
      %s282 = sphi 0, %s266
      %s288 = sphi 0, %s290
      %s291 = sphi 0, %s288
      %s292 = sphi 0, %s291
      %s308 = sphi 0, %s292
    $region4: #{tpu_custom_call.1} parent=1 // loop_header_branch
      %27 = sbr.rel (%p25) target = $region8
    $region5: #{tpu_custom_call.1} parent=1 // loop_body
      %s29 = ssub.s32 %s24, 1
      %s30 = ssub.s32 %s24, 2
      %s31 = sadd.s32 %s24, 1
      %s32 = smul.u32 %s24, 8
      %s33 = sld [smem:[#allocation3 + %s32]]
      %s34 = smul.u32 %s31, 8
      %s35 = sld [smem:[#allocation3 + %s34]]
      %s36 = ssub.s32 %s33, %s35
      %p37 = scmp.eq.s32.totalorder %s36, 0
      %s39 = sadd.s32 %s38, 1
      %s40 = scalar_select %p37, %s38, %s39
      %p43 = pneg %p37
      %p44 = scmp.eq.s32.totalorder %s24, 1
      %p45 = por %p43, %p44
      %p46 = scmp.ne.s32.totalorder %s38, %s41
      %p47 = scmp.eq.s32.totalorder %s24, 0
      %p48 = por %p46, %p47
      %p49 = scmp.ne.s32.totalorder %s38, %s41
      %p50 = scmp.eq.s32.totalorder %s29, 1
      %p51 = por %p49, %p50
      %p52 = scmp.ne.s32.totalorder %s41, %s42
      %p53 = scmp.eq.s32.totalorder %s29, 0
      %p54 = por %p52, %p53
      %p55 = scmp.ne.s32.totalorder %s41, %s42
      %p56 = scmp.eq.s32.totalorder %s30, 1
      %p57 = por %p55, %p56
      %p59 = scmp.ne.s32.totalorder %s42, %s58
      %p60 = scmp.eq.s32.totalorder %s30, 0
      %p61 = por %p59, %p60
      %s62 = smul.u32 %s24, 8
      %s63 = sadd.s32 %s62, 1
      %s64 = sld [smem:[#allocation3 + %s63]]
      %s65 = smul.u32 %s31, 8
      %s66 = sadd.s32 %s65, 1
      %s67 = sld [smem:[#allocation3 + %s66]]
      %s68 = ssub.s32 %s64, %s67
      %p69 = scmp.eq.s32.totalorder %s68, 0
      %s71 = sadd.s32 %s70, 1
      %s72 = scalar_select %p69, %s70, %s71
      %p75 = pneg %p69
      %p76 = scmp.eq.s32.totalorder %s24, 1
      %p77 = por %p75, %p76
      %p78 = scmp.ne.s32.totalorder %s70, %s73
      %p79 = scmp.eq.s32.totalorder %s24, 0
      %p80 = por %p78, %p79
      %p81 = scmp.ne.s32.totalorder %s70, %s73
      %p82 = scmp.eq.s32.totalorder %s29, 1
      %p83 = por %p81, %p82
      %p84 = scmp.ne.s32.totalorder %s73, %s74
      %p85 = scmp.eq.s32.totalorder %s29, 0
      %p86 = por %p84, %p85
      %p87 = scmp.ne.s32.totalorder %s73, %s74
      %p88 = scmp.eq.s32.totalorder %s30, 1
      %p89 = por %p87, %p88
      %p91 = scmp.ne.s32.totalorder %s74, %s90
      %p92 = scmp.eq.s32.totalorder %s30, 0
      %p93 = por %p91, %p92
      %s94 = smul.u32 %s24, 8
      %s95 = sadd.s32 %s94, 2
      %s96 = sld [smem:[#allocation3 + %s95]]
      %s97 = smul.u32 %s31, 8
      %s98 = sadd.s32 %s97, 2
      %s99 = sld [smem:[#allocation3 + %s98]]
      %s100 = ssub.s32 %s96, %s99
      %p101 = scmp.eq.s32.totalorder %s100, 0
      %s103 = sadd.s32 %s102, 1
      %s104 = scalar_select %p101, %s102, %s103
      %p107 = pneg %p101
      %p108 = scmp.eq.s32.totalorder %s24, 1
      %p109 = por %p107, %p108
      %p110 = scmp.ne.s32.totalorder %s102, %s105
      %p111 = scmp.eq.s32.totalorder %s24, 0
      %p112 = por %p110, %p111
      %p113 = scmp.ne.s32.totalorder %s102, %s105
      %p114 = scmp.eq.s32.totalorder %s29, 1
      %p115 = por %p113, %p114
      %p116 = scmp.ne.s32.totalorder %s105, %s106
      %p117 = scmp.eq.s32.totalorder %s29, 0
      %p118 = por %p116, %p117
      %p119 = scmp.ne.s32.totalorder %s105, %s106
      %p120 = scmp.eq.s32.totalorder %s30, 1
      %p121 = por %p119, %p120
      %p123 = scmp.ne.s32.totalorder %s106, %s122
      %p124 = scmp.eq.s32.totalorder %s30, 0
      %p125 = por %p123, %p124
      %s126 = smul.u32 %s24, 8
      %s127 = sadd.s32 %s126, 3
      %s128 = sld [smem:[#allocation3 + %s127]]
      %s129 = smul.u32 %s31, 8
      %s130 = sadd.s32 %s129, 3
      %s131 = sld [smem:[#allocation3 + %s130]]
      %s132 = ssub.s32 %s128, %s131
      %p133 = scmp.eq.s32.totalorder %s132, 0
      %s135 = sadd.s32 %s134, 1
      %s136 = scalar_select %p133, %s134, %s135
      %p139 = pneg %p133
      %p140 = scmp.eq.s32.totalorder %s24, 1
      %p141 = por %p139, %p140
      %p142 = scmp.ne.s32.totalorder %s134, %s137
      %p143 = scmp.eq.s32.totalorder %s24, 0
      %p144 = por %p142, %p143
      %p145 = scmp.ne.s32.totalorder %s134, %s137
      %p146 = scmp.eq.s32.totalorder %s29, 1
      %p147 = por %p145, %p146
      %p148 = scmp.ne.s32.totalorder %s137, %s138
      %p149 = scmp.eq.s32.totalorder %s29, 0
      %p150 = por %p148, %p149
      %p151 = scmp.ne.s32.totalorder %s137, %s138
      %p152 = scmp.eq.s32.totalorder %s30, 1
      %p153 = por %p151, %p152
      %p155 = scmp.ne.s32.totalorder %s138, %s154
      %p156 = scmp.eq.s32.totalorder %s30, 0
      %p157 = por %p155, %p156
      %s158 = smul.u32 %s24, 8
      %s159 = sadd.s32 %s158, 4
      %s160 = sld [smem:[#allocation3 + %s159]]
      %s161 = smul.u32 %s31, 8
      %s162 = sadd.s32 %s161, 4
      %s163 = sld [smem:[#allocation3 + %s162]]
      %s164 = ssub.s32 %s160, %s163
      %p165 = scmp.eq.s32.totalorder %s164, 0
      %s167 = sadd.s32 %s166, 1
      %s168 = scalar_select %p165, %s166, %s167
      %p171 = pneg %p165
      %p172 = scmp.eq.s32.totalorder %s24, 1
      %p173 = por %p171, %p172
      %p174 = scmp.ne.s32.totalorder %s166, %s169
      %p175 = scmp.eq.s32.totalorder %s24, 0
      %p176 = por %p174, %p175
      %p177 = scmp.ne.s32.totalorder %s166, %s169
      %p178 = scmp.eq.s32.totalorder %s29, 1
      %p179 = por %p177, %p178
      %p180 = scmp.ne.s32.totalorder %s169, %s170
      %p181 = scmp.eq.s32.totalorder %s29, 0
      %p182 = por %p180, %p181
      %p183 = scmp.ne.s32.totalorder %s169, %s170
      %p184 = scmp.eq.s32.totalorder %s30, 1
      %p185 = por %p183, %p184
      %p187 = scmp.ne.s32.totalorder %s170, %s186
      %p188 = scmp.eq.s32.totalorder %s30, 0
      %p189 = por %p187, %p188
      %s190 = smul.u32 %s24, 8
      %s191 = sadd.s32 %s190, 5
      %s192 = sld [smem:[#allocation3 + %s191]]
      %s193 = smul.u32 %s31, 8
      %s194 = sadd.s32 %s193, 5
      %s195 = sld [smem:[#allocation3 + %s194]]
      %s196 = ssub.s32 %s192, %s195
      %p197 = scmp.eq.s32.totalorder %s196, 0
      %s199 = sadd.s32 %s198, 1
      %s200 = scalar_select %p197, %s198, %s199
      %p203 = pneg %p197
      %p204 = scmp.eq.s32.totalorder %s24, 1
      %p205 = por %p203, %p204
      %p206 = scmp.ne.s32.totalorder %s198, %s201
      %p207 = scmp.eq.s32.totalorder %s24, 0
      %p208 = por %p206, %p207
      %p209 = scmp.ne.s32.totalorder %s198, %s201
      %p210 = scmp.eq.s32.totalorder %s29, 1
      %p211 = por %p209, %p210
      %p212 = scmp.ne.s32.totalorder %s201, %s202
      %p213 = scmp.eq.s32.totalorder %s29, 0
      %p214 = por %p212, %p213
      %p215 = scmp.ne.s32.totalorder %s201, %s202
      %p216 = scmp.eq.s32.totalorder %s30, 1
      %p217 = por %p215, %p216
      %p219 = scmp.ne.s32.totalorder %s202, %s218
      %p220 = scmp.eq.s32.totalorder %s30, 0
      %p221 = por %p219, %p220
      %s222 = smul.u32 %s24, 8
      %s223 = sadd.s32 %s222, 6
      %s224 = sld [smem:[#allocation3 + %s223]]
      %s225 = smul.u32 %s31, 8
      %s226 = sadd.s32 %s225, 6
      %s227 = sld [smem:[#allocation3 + %s226]]
      %s228 = ssub.s32 %s224, %s227
      %p229 = scmp.eq.s32.totalorder %s228, 0
      %s231 = sadd.s32 %s230, 1
      %s232 = scalar_select %p229, %s230, %s231
      %p235 = pneg %p229
      %p236 = scmp.eq.s32.totalorder %s24, 1
      %p237 = por %p235, %p236
      %p238 = scmp.ne.s32.totalorder %s230, %s233
      %p239 = scmp.eq.s32.totalorder %s24, 0
      %p240 = por %p238, %p239
      %p241 = scmp.ne.s32.totalorder %s230, %s233
      %p242 = scmp.eq.s32.totalorder %s29, 1
      %p243 = por %p241, %p242
      %p244 = scmp.ne.s32.totalorder %s233, %s234
      %p245 = scmp.eq.s32.totalorder %s29, 0
      %p246 = por %p244, %p245
      %p247 = scmp.ne.s32.totalorder %s233, %s234
      %p248 = scmp.eq.s32.totalorder %s30, 1
      %p249 = por %p247, %p248
      %p251 = scmp.ne.s32.totalorder %s234, %s250
      %p252 = scmp.eq.s32.totalorder %s30, 0
      %p253 = por %p251, %p252
      %s254 = smul.u32 %s24, 8
      %s255 = sadd.s32 %s254, 7
      %s256 = sld [smem:[#allocation3 + %s255]]
      %s257 = smul.u32 %s31, 8
      %s258 = sadd.s32 %s257, 7
      %s259 = sld [smem:[#allocation3 + %s258]]
      %s260 = ssub.s32 %s256, %s259
      %p261 = scmp.eq.s32.totalorder %s260, 0
      %s263 = sadd.s32 %s262, 1
      %s264 = scalar_select %p261, %s262, %s263
      %p267 = pneg %p261
      %p268 = scmp.eq.s32.totalorder %s24, 1
      %p269 = por %p267, %p268
      %p270 = scmp.ne.s32.totalorder %s262, %s265
      %p271 = scmp.eq.s32.totalorder %s24, 0
      %p272 = por %p270, %p271
      %p273 = scmp.ne.s32.totalorder %s262, %s265
      %p274 = scmp.eq.s32.totalorder %s29, 1
      %p275 = por %p273, %p274
      %p276 = scmp.ne.s32.totalorder %s265, %s266
      %p277 = scmp.eq.s32.totalorder %s29, 0
      %p278 = por %p276, %p277
      %p279 = scmp.ne.s32.totalorder %s265, %s266
      %p280 = scmp.eq.s32.totalorder %s30, 1
      %p281 = por %p279, %p280
      %p283 = scmp.ne.s32.totalorder %s266, %s282
      %p284 = scmp.eq.s32.totalorder %s30, 0
      %p285 = por %p283, %p284
      %s286 = ssub.s32 %s24, %s31
      %p287 = scmp.eq.s32.totalorder %s286, 0
      %s289 = sadd.s32 %s288, 1
      %s290 = scalar_select %p287, %s288, %s289
      %p293 = pneg %p287
      %p294 = scmp.eq.s32.totalorder %s24, 1
      %p295 = por %p293, %p294
      %p296 = scmp.ne.s32.totalorder %s288, %s291
      %p297 = scmp.eq.s32.totalorder %s24, 0
      %p298 = por %p296, %p297
      %p299 = scmp.ne.s32.totalorder %s288, %s291
      %p300 = scmp.eq.s32.totalorder %s29, 1
      %p301 = por %p299, %p300
      %p302 = scmp.ne.s32.totalorder %s291, %s292
      %p303 = scmp.eq.s32.totalorder %s29, 0
      %p304 = por %p302, %p303
      %p305 = scmp.ne.s32.totalorder %s291, %s292
      %p306 = scmp.eq.s32.totalorder %s30, 1
      %p307 = por %p305, %p306
      %p309 = scmp.ne.s32.totalorder %s292, %s308
      %p310 = scmp.eq.s32.totalorder %s30, 0
      %p311 = por %p309, %p310
      %p312 = scmp.le.s32.totalorder 1, %s24
      %p313 = scmp.lt.s32.totalorder %s24, 3
      %p314 = pnand %p312, %p313
      %p315 = pneg %p314
      // Predicated region
      $region9: #{tpu_custom_call.1} parent=5 // pred_check
        _
      $region10: #{tpu_custom_call.1} parent=5 // pred_check_branch
        %317 = sbr.rel (%p314) target = $region12
      $region11: #{tpu_custom_call.1} parent=5 // pred_region
        %s318 = ssub.s32 %s24, 1
      $region12: #{tpu_custom_call.1} parent=5 // pred_fallthru
        _
      %p319 = scmp.lt.s32.totalorder %s24, 2
      // Predicated region
      $region13: #{tpu_custom_call.1} parent=5 // pred_check
        %p320 = pneg %p319
      $region14: #{tpu_custom_call.1} parent=5 // pred_check_branch
        %322 = sbr.rel (%p320) target = $region16
      $region15: #{tpu_custom_call.1} parent=5 // pred_region
        // Predicated region
        $region17: #{tpu_custom_call.1} parent=15 // pred_check
          %p323 = pneg %p48
        $region18: #{tpu_custom_call.1} parent=15 // pred_check_branch
          %325 = sbr.rel (%p323) target = $region20
        $region19: #{tpu_custom_call.1} parent=15 // pred_region
          %s326 = smul.u32 %s24, 8
          %s327 = sld [smem:[#allocation3 + %s326]]
          %p328 = scmp.lt.s32.totalorder %s327, 63
          %s329 = scalar_select %p328, %s327, 63
          %s330 = scalar_lea.vmem %s1, %s329
          %s331 = smul.u32 %s24, 8
          %s332 = sld [smem:[#allocation3 + %s331]]
        $region20: #{tpu_custom_call.1} parent=15 // pred_fallthru
          _
        // Predicated region
        $region21: #{tpu_custom_call.1} parent=15 // pred_check
          %p333 = pneg %p80
        $region22: #{tpu_custom_call.1} parent=15 // pred_check_branch
          %335 = sbr.rel (%p333) target = $region24
        $region23: #{tpu_custom_call.1} parent=15 // pred_region
          %s336 = smul.u32 %s24, 8
          %s337 = sadd.s32 %s336, 1
          %s338 = sld [smem:[#allocation3 + %s337]]
          %p339 = scmp.lt.s32.totalorder %s338, 63
          %s340 = scalar_select %p339, %s338, 63
          %s341 = scalar_lea.vmem %s2, %s340
          %s342 = smul.u32 %s24, 8
          %s343 = sadd.s32 %s342, 1
          %s344 = sld [smem:[#allocation3 + %s343]]
        $region24: #{tpu_custom_call.1} parent=15 // pred_fallthru
          _
        // Predicated region
        $region25: #{tpu_custom_call.1} parent=15 // pred_check
          %p345 = pneg %p112
        $region26: #{tpu_custom_call.1} parent=15 // pred_check_branch
          %347 = sbr.rel (%p345) target = $region28
        $region27: #{tpu_custom_call.1} parent=15 // pred_region
          %s348 = smul.u32 %s24, 8
          %s349 = sadd.s32 %s348, 2
          %s350 = sld [smem:[#allocation3 + %s349]]
          %p351 = scmp.lt.s32.totalorder %s350, 63
          %s352 = scalar_select %p351, %s350, 63
          %s353 = scalar_lea.vmem %s3, %s352
          %s354 = smul.u32 %s24, 8
          %s355 = sadd.s32 %s354, 2
          %s356 = sld [smem:[#allocation3 + %s355]]
        $region28: #{tpu_custom_call.1} parent=15 // pred_fallthru
          _
        // Predicated region
        $region29: #{tpu_custom_call.1} parent=15 // pred_check
          %p357 = pneg %p144
        $region30: #{tpu_custom_call.1} parent=15 // pred_check_branch
          %359 = sbr.rel (%p357) target = $region32
        $region31: #{tpu_custom_call.1} parent=15 // pred_region
          %s360 = smul.u32 %s24, 8
          %s361 = sadd.s32 %s360, 3
          %s362 = sld [smem:[#allocation3 + %s361]]
          %p363 = scmp.lt.s32.totalorder %s362, 63
          %s364 = scalar_select %p363, %s362, 63
          %s365 = scalar_lea.vmem %s4, %s364
          %s366 = smul.u32 %s24, 8
          %s367 = sadd.s32 %s366, 3
          %s368 = sld [smem:[#allocation3 + %s367]]
        $region32: #{tpu_custom_call.1} parent=15 // pred_fallthru
          _
        // Predicated region
        $region33: #{tpu_custom_call.1} parent=15 // pred_check
          %p369 = pneg %p176
        $region34: #{tpu_custom_call.1} parent=15 // pred_check_branch
          %371 = sbr.rel (%p369) target = $region36
        $region35: #{tpu_custom_call.1} parent=15 // pred_region
          %s372 = smul.u32 %s24, 8
          %s373 = sadd.s32 %s372, 4
          %s374 = sld [smem:[#allocation3 + %s373]]
          %p375 = scmp.lt.s32.totalorder %s374, 63
          %s376 = scalar_select %p375, %s374, 63
          %s377 = scalar_lea.vmem %s5, %s376
          %s378 = smul.u32 %s24, 8
          %s379 = sadd.s32 %s378, 4
          %s380 = sld [smem:[#allocation3 + %s379]]
        $region36: #{tpu_custom_call.1} parent=15 // pred_fallthru
          _
        // Predicated region
        $region37: #{tpu_custom_call.1} parent=15 // pred_check
          %p381 = pneg %p208
        $region38: #{tpu_custom_call.1} parent=15 // pred_check_branch
          %383 = sbr.rel (%p381) target = $region40
        $region39: #{tpu_custom_call.1} parent=15 // pred_region
          %s384 = smul.u32 %s24, 8
          %s385 = sadd.s32 %s384, 5
          %s386 = sld [smem:[#allocation3 + %s385]]
          %p387 = scmp.lt.s32.totalorder %s386, 63
          %s388 = scalar_select %p387, %s386, 63
          %s389 = scalar_lea.vmem %s6, %s388
          %s390 = smul.u32 %s24, 8
          %s391 = sadd.s32 %s390, 5
          %s392 = sld [smem:[#allocation3 + %s391]]
        $region40: #{tpu_custom_call.1} parent=15 // pred_fallthru
          _
        // Predicated region
        $region41: #{tpu_custom_call.1} parent=15 // pred_check
          %p393 = pneg %p240
        $region42: #{tpu_custom_call.1} parent=15 // pred_check_branch
          %395 = sbr.rel (%p393) target = $region44
        $region43: #{tpu_custom_call.1} parent=15 // pred_region
          %s396 = smul.u32 %s24, 8
          %s397 = sadd.s32 %s396, 6
          %s398 = sld [smem:[#allocation3 + %s397]]
          %p399 = scmp.lt.s32.totalorder %s398, 63
          %s400 = scalar_select %p399, %s398, 63
          %s401 = scalar_lea.vmem %s7, %s400
          %s402 = smul.u32 %s24, 8
          %s403 = sadd.s32 %s402, 6
          %s404 = sld [smem:[#allocation3 + %s403]]
        $region44: #{tpu_custom_call.1} parent=15 // pred_fallthru
          _
        // Predicated region
        $region45: #{tpu_custom_call.1} parent=15 // pred_check
          %p405 = pneg %p272
        $region46: #{tpu_custom_call.1} parent=15 // pred_check_branch
          %407 = sbr.rel (%p405) target = $region48
        $region47: #{tpu_custom_call.1} parent=15 // pred_region
          %s408 = smul.u32 %s24, 8
          %s409 = sadd.s32 %s408, 7
          %s410 = sld [smem:[#allocation3 + %s409]]
          %p411 = scmp.lt.s32.totalorder %s410, 63
          %s412 = scalar_select %p411, %s410, 63
          %s413 = scalar_lea.vmem %s8, %s412
          %s414 = smul.u32 %s24, 8
          %s415 = sadd.s32 %s414, 7
          %s416 = sld [smem:[#allocation3 + %s415]]
        $region48: #{tpu_custom_call.1} parent=15 // pred_fallthru
          _
      $region16: #{tpu_custom_call.1} parent=5 // pred_fallthru
        _
      %p417 = scmp.le.s32.totalorder 1, %s24
      %p418 = scmp.lt.s32.totalorder %s24, 3
      %p419 = pnand %p417, %p418
      %p420 = pneg %p419
      // Predicated region
      $region49: #{tpu_custom_call.1} parent=5 // pred_check
        _
      $region50: #{tpu_custom_call.1} parent=5 // pred_check_branch
        %422 = sbr.rel (%p419) target = $region52
      $region51: #{tpu_custom_call.1} parent=5 // pred_region
        %s423 = ssub.s32 %s24, 1
        %s424 = smul.u32 %s29, 8
        %s425 = sld [smem:[#allocation3 + %s424]]
        %p426 = scmp.lt.s32.totalorder %s425, 63
        %s427 = scalar_select %p426, %s425, 63
        %s428 = scalar_lea.vmem %s1, %s427
        %p429 = pneg %p54
        %p430 = pneg %p51
        %s431 = smul.u32 %s29, 8
        %s432 = sadd.s32 %s431, 1
        %s433 = sld [smem:[#allocation3 + %s432]]
        %p434 = scmp.lt.s32.totalorder %s433, 63
        %s435 = scalar_select %p434, %s433, 63
        %s436 = scalar_lea.vmem %s2, %s435
        %p437 = pneg %p86
        %p438 = pneg %p83
        %s439 = smul.u32 %s29, 8
        %s440 = sadd.s32 %s439, 2
        %s441 = sld [smem:[#allocation3 + %s440]]
        %p442 = scmp.lt.s32.totalorder %s441, 63
        %s443 = scalar_select %p442, %s441, 63
        %s444 = scalar_lea.vmem %s3, %s443
        %p445 = pneg %p118
        %p446 = pneg %p115
        %s447 = smul.u32 %s29, 8
        %s448 = sadd.s32 %s447, 3
        %s449 = sld [smem:[#allocation3 + %s448]]
        %p450 = scmp.lt.s32.totalorder %s449, 63
        %s451 = scalar_select %p450, %s449, 63
        %s452 = scalar_lea.vmem %s4, %s451
        %p453 = pneg %p150
        %p454 = pneg %p147
        %s455 = smul.u32 %s29, 8
        %s456 = sadd.s32 %s455, 4
        %s457 = sld [smem:[#allocation3 + %s456]]
        %p458 = scmp.lt.s32.totalorder %s457, 63
        %s459 = scalar_select %p458, %s457, 63
        %s460 = scalar_lea.vmem %s5, %s459
        %p461 = pneg %p182
        %p462 = pneg %p179
        %s463 = smul.u32 %s29, 8
        %s464 = sadd.s32 %s463, 5
        %s465 = sld [smem:[#allocation3 + %s464]]
        %p466 = scmp.lt.s32.totalorder %s465, 63
        %s467 = scalar_select %p466, %s465, 63
        %s468 = scalar_lea.vmem %s6, %s467
        %p469 = pneg %p214
        %p470 = pneg %p211
        %s471 = smul.u32 %s29, 8
        %s472 = sadd.s32 %s471, 6
        %s473 = sld [smem:[#allocation3 + %s472]]
        %p474 = scmp.lt.s32.totalorder %s473, 63
        %s475 = scalar_select %p474, %s473, 63
        %s476 = scalar_lea.vmem %s7, %s475
        %p477 = pneg %p246
        %p478 = pneg %p243
        %s479 = smul.u32 %s29, 8
        %s480 = sadd.s32 %s479, 7
        %s481 = sld [smem:[#allocation3 + %s480]]
        %p482 = scmp.lt.s32.totalorder %s481, 63
        %s483 = scalar_select %p482, %s481, 63
        %s484 = scalar_lea.vmem %s8, %s483
        %p485 = pneg %p278
        %p486 = pneg %p275
        %p487 = pneg %p304
        %p488 = pneg %p301
        %s489 = sand.u32 %s291, 1
        %s490 = scalar_lea.sflag [#allocation5], %s489
        %s491 = sand.u32 %s291, 1
        %s492 = smul.addr %s491, 8
        %s493 = scalar_lea.vmem [#allocation4], %s492
        %s494 = smul.u32 %s29, 8
        %s495 = sld [smem:[#allocation3 + %s494]]
        %p496 = scmp.lt.s32.totalorder %s495, 63
        %s497 = scalar_select %p496, %s495, 63
        %s498 = scalar_lea.vmem %s1, %s497
        %s499 = smul.u32 %s29, 8
        %s500 = sld [smem:[#allocation3 + %s499]]
        %s501 = smul.u32 %s29, 8
        %s502 = sadd.s32 %s501, 1
        %s503 = sld [smem:[#allocation3 + %s502]]
        %p504 = scmp.lt.s32.totalorder %s503, 63
        %s505 = scalar_select %p504, %s503, 63
        %s506 = scalar_lea.vmem %s2, %s505
        %s507 = smul.u32 %s29, 8
        %s508 = sadd.s32 %s507, 1
        %s509 = sld [smem:[#allocation3 + %s508]]
        %s510 = smul.u32 %s29, 8
        %s511 = sadd.s32 %s510, 2
        %s512 = sld [smem:[#allocation3 + %s511]]
        %p513 = scmp.lt.s32.totalorder %s512, 63
        %s514 = scalar_select %p513, %s512, 63
        %s515 = scalar_lea.vmem %s3, %s514
        %s516 = smul.u32 %s29, 8
        %s517 = sadd.s32 %s516, 2
        %s518 = sld [smem:[#allocation3 + %s517]]
        %s519 = smul.u32 %s29, 8
        %s520 = sadd.s32 %s519, 3
        %s521 = sld [smem:[#allocation3 + %s520]]
        %p522 = scmp.lt.s32.totalorder %s521, 63
        %s523 = scalar_select %p522, %s521, 63
        %s524 = scalar_lea.vmem %s4, %s523
        %s525 = smul.u32 %s29, 8
        %s526 = sadd.s32 %s525, 3
        %s527 = sld [smem:[#allocation3 + %s526]]
        %s528 = smul.u32 %s29, 8
        %s529 = sadd.s32 %s528, 4
        %s530 = sld [smem:[#allocation3 + %s529]]
        %p531 = scmp.lt.s32.totalorder %s530, 63
        %s532 = scalar_select %p531, %s530, 63
        %s533 = scalar_lea.vmem %s5, %s532
        %s534 = smul.u32 %s29, 8
        %s535 = sadd.s32 %s534, 4
        %s536 = sld [smem:[#allocation3 + %s535]]
        %s537 = smul.u32 %s29, 8
        %s538 = sadd.s32 %s537, 5
        %s539 = sld [smem:[#allocation3 + %s538]]
        %p540 = scmp.lt.s32.totalorder %s539, 63
        %s541 = scalar_select %p540, %s539, 63
        %s542 = scalar_lea.vmem %s6, %s541
        %s543 = smul.u32 %s29, 8
        %s544 = sadd.s32 %s543, 5
        %s545 = sld [smem:[#allocation3 + %s544]]
        %s546 = smul.u32 %s29, 8
        %s547 = sadd.s32 %s546, 6
        %s548 = sld [smem:[#allocation3 + %s547]]
        %p549 = scmp.lt.s32.totalorder %s548, 63
        %s550 = scalar_select %p549, %s548, 63
        %s551 = scalar_lea.vmem %s7, %s550
        %s552 = smul.u32 %s29, 8
        %s553 = sadd.s32 %s552, 6
        %s554 = sld [smem:[#allocation3 + %s553]]
        %s555 = smul.u32 %s29, 8
        %s556 = sadd.s32 %s555, 7
        %s557 = sld [smem:[#allocation3 + %s556]]
        %p558 = scmp.lt.s32.totalorder %s557, 63
        %s559 = scalar_select %p558, %s557, 63
        %s560 = scalar_lea.vmem %s8, %s559
        %s561 = smul.u32 %s29, 8
        %s562 = sadd.s32 %s561, 7
        %s563 = sld [smem:[#allocation3 + %s562]]
        %v564 = vld [vmem:[%s498] sm:$0x1]
        %vm565 = vcmask 253952
        %566 = vst.msk [vmem:[%s493] sm:$0x1] %vm565, %v564
        %v567 = vld [vmem:[%s506] sm:$0x1]
        %568 = vst.msk [vmem:[%s493 + $0x1] sm:$0x1] %vm565, %v567
        %v569 = vld [vmem:[%s515] sm:$0x1]
        %570 = vst.msk [vmem:[%s493 + $0x2] sm:$0x1] %vm565, %v569
        %v571 = vld [vmem:[%s524] sm:$0x1]
        %572 = vst.msk [vmem:[%s493 + $0x3] sm:$0x1] %vm565, %v571
        %v573 = vld [vmem:[%s533] sm:$0x1]
        %574 = vst.msk [vmem:[%s493 + $0x4] sm:$0x1] %vm565, %v573
        %v575 = vld [vmem:[%s542] sm:$0x1]
        %576 = vst.msk [vmem:[%s493 + $0x5] sm:$0x1] %vm565, %v575
        %v577 = vld [vmem:[%s551] sm:$0x1]
        %578 = vst.msk [vmem:[%s493 + $0x6] sm:$0x1] %vm565, %v577
        %v579 = vld [vmem:[%s560] sm:$0x1]
        %580 = vst.msk [vmem:[%s493 + $0x7] sm:$0x1] %vm565, %v579
        %s581 = sand.u32 %s291, 1
        %s582 = scalar_lea.sflag [#allocation5], %s581
        %s583 = sand.u32 %s291, 1
        %s584 = smul.addr %s583, 8
        %s585 = scalar_lea.vmem [#allocation4], %s584
        // Predicated region
        $region53: #{tpu_custom_call.1} parent=51 // pred_check
          %p586 = pneg %p301
        $region54: #{tpu_custom_call.1} parent=51 // pred_check_branch
          %588 = sbr.rel (%p586) target = $region56
        $region55: #{tpu_custom_call.1} parent=51 // pred_region
          %s590 = ssub.s32 128, 128
          %591 = vsyncadd %s582, %s590
          %s592 = smul.addr %s29, 128
          %s593 = scalar_lea.hbm %s9, %s592
          %s595 = sshll.u32 %s585, 4
          %s596 = int_to_ptr.vmem [resolvable:$true] %s595
          %598 = dma.vmem_to_hbm [thread:$0]  %s596, 128, %s593, %s582
        $region56: #{tpu_custom_call.1} parent=51 // pred_fallthru
          _
      $region52: #{tpu_custom_call.1} parent=5 // pred_fallthru
        _
      %p599 = scmp.le.s32.totalorder 2, %s24
      // Predicated region
      $region57: #{tpu_custom_call.1} parent=5 // pred_check
        %p600 = pneg %p599
      $region58: #{tpu_custom_call.1} parent=5 // pred_check_branch
        %602 = sbr.rel (%p600) target = $region60
      $region59: #{tpu_custom_call.1} parent=5 // pred_region
        %s603 = ssub.s32 %s24, 2
        // Predicated region
        $region61: #{tpu_custom_call.1} parent=59 // pred_check
          %p604 = pneg %p307
        $region62: #{tpu_custom_call.1} parent=59 // pred_check_branch
          %606 = sbr.rel (%p604) target = $region64
        $region63: #{tpu_custom_call.1} parent=59 // pred_region
          %s607 = sand.u32 %s292, 1
          %s608 = scalar_lea.sflag [#allocation5], %s607
          %s609 = sand.u32 %s292, 1
          %s610 = smul.addr %s609, 8
          %s611 = scalar_lea.vmem [#allocation4], %s610
          %612 = dma.done %s608, 128
        $region64: #{tpu_custom_call.1} parent=59 // pred_fallthru
          _
      $region60: #{tpu_custom_call.1} parent=5 // pred_fallthru
        _
    $region6: #{tpu_custom_call.1} parent=1 // loop_footer
      %s28 = sadd.s32 1, %s24
    $region7: #{tpu_custom_call.1} parent=1 // loop_footer_branch
      %23 = sbr.rel target = $region3
    $region8: #{tpu_custom_call.1} parent=1 // loop_exit
      _
    %613 = vsyncpa [#allocation5], 1
    %s614 = scalar_lea.sflag [#allocation5], 1
    %615 = vsyncpa %s614, 1

</llo_original>
